<compile_context>
chip_gen: v7x
topology: tpu7x:2x2x1
jax: 0.10.0
libtpu: 0.0.40
codegen_flags: <defaults>
</compile_context>

<pallas_src>
import math

import jax
import jax.numpy as jnp
from jax.experimental import pallas as pl
from jax.experimental.pallas import tpu as pltpu

BN_EPS = 1e-5

_VMEM = pl.BlockSpec(memory_space=pltpu.MemorySpace.VMEM)


def _round_up(x, m):
    return ((x + m - 1) // m) * m


def _pick_tile(dim, prefs):
    for t in prefs:
        if dim >= t and dim % t == 0:
            return t
    return dim


def _pad2d(a, rows, cols):
    r, c = a.shape
    return jnp.pad(a, ((0, rows - r), (0, cols - c)))


# ----------------------------------------------------------------------------
# Fused tiled matmul + one-pass BN statistics (sum / sum-of-squares)
# ----------------------------------------------------------------------------
def _matmul_stats_kernel(p_ref, w_ref, y_ref, ps_ref, pq_ref, acc_ref):
    k = pl.program_id(2)

    @pl.when(k == 0)
    def _():
        acc_ref[...] = jnp.zeros_like(acc_ref)

    acc_ref[...] += jnp.dot(
        p_ref[...], w_ref[...], preferred_element_type=jnp.float32
    )

    @pl.when(k == pl.num_programs(2) - 1)
    def _():
        y = acc_ref[...]
        y_ref[...] = y
        s = jnp.sum(y, axis=0, keepdims=True)          # (1, TN) partial sum
        q = jnp.sum(y * y, axis=0, keepdims=True)      # (1, TN) partial sumsq
        ps_ref[...] = jnp.broadcast_to(s, ps_ref.shape)
        pq_ref[...] = jnp.broadcast_to(q, pq_ref.shape)


def _matmul_with_stats(patches, wmat, Mpad, Kpad, Cpad, TM, TK, TN):
    mt, nt, kt = Mpad // TM, Cpad // TN, Kpad // TK
    cost = pl.CostEstimate(
        flops=2 * Mpad * Kpad * Cpad,
        transcendentals=0,
        bytes_accessed=(
            2 * (Mpad * Kpad + Kpad * Cpad)            # bf16 inputs
            + 4 * (Mpad * Cpad + 2 * 8 * mt * Cpad)    # f32 outputs
        ),
    )
    y, ps, pq = pl.pallas_call(
        _matmul_stats_kernel,
        out_shape=(
            jax.ShapeDtypeStruct((Mpad, Cpad), jnp.float32),
            jax.ShapeDtypeStruct((mt * 8, Cpad), jnp.float32),
            jax.ShapeDtypeStruct((mt * 8, Cpad), jnp.float32),
        ),
        grid=(mt, nt, kt),
        in_specs=[
            pl.BlockSpec((TM, TK), lambda i, j, k: (i, k)),
            pl.BlockSpec((TK, TN), lambda i, j, k: (k, j)),
        ],
        out_specs=(
            pl.BlockSpec((TM, TN), lambda i, j, k: (i, j)),
            pl.BlockSpec((8, TN), lambda i, j, k: (i, j)),
            pl.BlockSpec((8, TN), lambda i, j, k: (i, j)),
        ),
        scratch_shapes=[pltpu.VMEM((TM, TN), jnp.float32)],
        compiler_params=pltpu.CompilerParams(
            dimension_semantics=("parallel", "parallel", "arbitrary")
        ),
        cost_estimate=cost,
    )(patches, wmat)
    # Tiny cross-tile reduction of the per-M-tile partial statistics.
    sums = ps.reshape(mt, 8, Cpad)[:, 0, :].sum(axis=0)
    sumsq = pq.reshape(mt, 8, Cpad)[:, 0, :].sum(axis=0)
    return y, sums, sumsq


# ----------------------------------------------------------------------------
# im2col glue (bf16) + conv orchestration
# ----------------------------------------------------------------------------
def _im2col(x, kh, kw, stride, padding):
    N, H, W, Cin = x.shape
    Hout = (H + 2 * padding - kh) // stride + 1
    Wout = (W + 2 * padding - kw) // stride + 1
    M = N * Hout * Wout
    if kh == 1 and kw == 1 and padding == 0:
        patches = x[:, ::stride, ::stride, :].reshape(M, Cin)
    else:
        xp = jnp.pad(x, ((0, 0), (padding, padding), (padding, padding), (0, 0)))
        cols = []
        for i in range(kh):
            for j in range(kw):
                cols.append(
                    xp[:, i:i + stride * Hout:stride, j:j + stride * Wout:stride, :]
                )
        patches = jnp.concatenate(cols, axis=-1).reshape(M, kh * kw * Cin)
    return patches, Hout, Wout


def _conv_matmul(x, w_hwio, *, stride, padding):
    kh, kw, _, Cout = w_hwio.shape
    patches, Hout, Wout = _im2col(x, kh, kw, stride, padding)
    M, K = patches.shape
    Mpad = _round_up(M, 8)
    TM = _pick_tile(Mpad, (256, 128, 64, 32, 16, 8))
    Kpad = _round_up(K, 128)
    TK = _pick_tile(Kpad, (512, 256, 128))
    Cpad = _round_up(Cout, 128)
    TN = _pick_tile(Cpad, (256, 128))
    p = _pad2d(patches.astype(jnp.bfloat16), Mpad, Kpad)     # bf16 MXU feed
    wm = _pad2d(w_hwio.reshape(K, Cout).astype(jnp.bfloat16), Kpad, Cpad)
    y, sums, sumsq = _matmul_with_stats(p, wm, Mpad, Kpad, Cpad, TM, TK, TN)
    dims = dict(N=x.shape[0], Hout=Hout, Wout=Wout, M=M, Cout=Cout,
                Mpad=Mpad, Cpad=Cpad, TM=TM)
    return y, sums, sumsq, dims


def _bn_affine(sums, sumsq, m_true, gamma, beta, Cpad):
    """Training-mode BatchNorm (biased batch variance) folded to scale/shift."""
    g = jnp.pad(gamma, (0, Cpad - gamma.shape[0]))
    b = jnp.pad(beta, (0, Cpad - beta.shape[0]))
    mean = sums / m_true
    var = jnp.maximum(sumsq / m_true - mean * mean, 0.0)
    inv = jax.lax.rsqrt(var + BN_EPS)
    scale = g * inv
    shift = b - mean * scale
    return scale.reshape(1, Cpad), shift.reshape(1, Cpad)


# ----------------------------------------------------------------------------
# Epilogue kernel: scale/shift (+ residual, optionally with its own fused BN
# affine for the downsample path) (+ ReLU)
# ----------------------------------------------------------------------------
def _make_epilogue_kernel(relu, res_mode):
    def finish(y, scale, shift, res):
        out = y * scale + shift
        if res is not None:
            out = out + res
        if relu:
            out = jnp.maximum(out, 0.0)
        return out

    if res_mode is None:
        def kernel(y_ref, s_ref, b_ref, o_ref):
            o_ref[...] = finish(y_ref[...], s_ref[...], b_ref[...], None)
    elif res_mode == "plain":
        def kernel(y_ref, s_ref, b_ref, r_ref, o_ref):
            o_ref[...] = finish(y_ref[...], s_ref[...], b_ref[...], r_ref[...])
    else:  # "bn": residual is a raw downsample matmul output + its BN affine
        def kernel(y_ref, s_ref, b_ref, yd_ref, sd_ref, bd_ref, o_ref):
            res = yd_ref[...] * sd_ref[...] + bd_ref[...]
            o_ref[...] = finish(y_ref[...], s_ref[...], b_ref[...], res)
    return kernel


def _epilogue(y, scale, shift, *, relu, TM, res_mode=None, res_args=()):
    Mpad, Cpad = y.shape
    mt = Mpad // TM
    row_spec = pl.BlockSpec((TM, Cpad), lambda i: (i, 0))
    vec_spec = pl.BlockSpec((1, Cpad), lambda i: (0, 0))
    args = [y, scale, shift]
    specs = [row_spec, vec_spec, vec_spec]
    if res_mode == "plain":
        args += list(res_args)
        specs += [row_spec]
    elif res_mode == "bn":
        args += list(res_args)
        specs += [row_spec, vec_spec, vec_spec]
    return pl.pallas_call(
        _make_epilogue_kernel(relu, res_mode),
        out_shape=jax.ShapeDtypeStruct((Mpad, Cpad), jnp.float32),
        grid=(mt,),
        in_specs=specs,
        out_specs=row_spec,
        compiler_params=pltpu.CompilerParams(dimension_semantics=("parallel",)),
    )(*args)


def _unpack(out2d, d):
    return out2d[: d["M"], : d["Cout"]].reshape(
        d["N"], d["Hout"], d["Wout"], d["Cout"]
    )


def conv_bn(x, w_hwio, gamma, beta, *, stride, padding, relu):
    y, s, q, d = _conv_matmul(x, w_hwio, stride=stride, padding=padding)
    scale, shift = _bn_affine(s, q, d["M"], gamma, beta, d["Cpad"])
    out = _epilogue(y, scale, shift, relu=relu, TM=d["TM"])
    return _unpack(out, d)


# ----------------------------------------------------------------------------
# MaxPool 3x3 / stride 2 / pad 1 — phase-decomposed windows, in-kernel max tree
# ----------------------------------------------------------------------------
def _make_maxpool_kernel(k, stride, Hout, Wout):
    def kernel(*refs):
        o_ref = refs[-1]
        phase_refs = refs[:-1]
        out = None
        for i in range(k):
            for j in range(k):
                pr = phase_refs[(i % stride) * stride + (j % stride)]
                v = pr[:, i // stride:i // stride + Hout,
                       j // stride:j // stride + Wout, :]
                out = v if out is None else jnp.maximum(out, v)
        o_ref[...] = out
    return kernel


def maxpool2d(x, k=3, stride=2, pad=1):
    N, H, W, C = x.shape
    Hout = (H + 2 * pad - k) // stride + 1
    Wout = (W + 2 * pad - k) // stride + 1
    neg = jnp.finfo(x.dtype).min
    xp = jnp.pad(x, ((0, 0), (pad, pad), (pad, pad), (0, 0)), constant_values=neg)
    off = (k - 1) // stride
    Hp_, Wp_ = Hout + off, Wout + off
    # stride-phase decomposition: total bytes == padded input, no k*k blow-up.
    phases = []
    for a in range(stride):
        for b in range(stride):
            ph = xp[:, a::stride, b::stride, :][:, :Hp_, :Wp_, :]
            ph = jnp.pad(
                ph,
                ((0, 0), (0, Hp_ - ph.shape[1]), (0, Wp_ - ph.shape[2]), (0, 0)),
                constant_values=neg,
            )
            phases.append(ph)
    return pl.pallas_call(
        _make_maxpool_kernel(k, stride, Hout, Wout),
        out_shape=jax.ShapeDtypeStruct((N, Hout, Wout, C), x.dtype),
        in_specs=[_VMEM] * len(phases),
        out_specs=_VMEM,
    )(*phases)


# ----------------------------------------------------------------------------
# Fused adaptive-avg-pool(1,1) + flatten + Linear head
# ----------------------------------------------------------------------------
def _head_kernel(x_ref, w_ref, b_ref, o_ref):
    xm = jnp.mean(x_ref[...], axis=1)                  # avgpool over H*W (f32)
    o_ref[...] = (
        jnp.dot(xm.astype(jnp.bfloat16), w_ref[...],
                preferred_element_type=jnp.float32)
        + b_ref[...]
    )


def avgpool_fc(x, w, bias):
    N, H, W, C = x.shape
    num_classes = w.shape[1]
    Npad = _round_up(N, 8)
    Kpad = _round_up(num_classes, 128)                 # lane-dense FC output
    xr = jnp.pad(x.reshape(N, H * W, C), ((0, Npad - N), (0, 0), (0, 0)))
    wp = _pad2d(w.astype(jnp.bfloat16), C, Kpad)
    bp = jnp.pad(bias, (0, Kpad - num_classes)).reshape(1, Kpad)
    out = pl.pallas_call(
        _head_kernel,
        out_shape=jax.ShapeDtypeStruct((Npad, Kpad), jnp.float32),
        in_specs=[_VMEM] * 3,
        out_specs=_VMEM,
    )(xr, wp, bp)
    return out[:N, :num_classes]


# ----------------------------------------------------------------------------
# ResNet (basic-block variant, num_layers in {18, 34})
# ----------------------------------------------------------------------------
LAYERS = {18: [2, 2, 2, 2], 34: [3, 4, 6, 3]}
# TODO(synk): bottleneck Block (ResNet-50/101/152, expansion=4) not implemented;
# the provided spec only references an external `Block`, BasicBlock assumed.


def _conv_w(key, kh, kw, cin, cout):
    scale = 1.0 / math.sqrt(kh * kw * cin)
    return jax.random.normal(key, (kh, kw, cin, cout), jnp.float32) * scale


def init_resnet_params(key, img_channels, num_layers, num_classes):
    assert num_layers in LAYERS, "only basic-block ResNets (18/34) implemented"
    keys = iter(jax.random.split(key, 128))
    params = {
        "conv1_w": _conv_w(next(keys), 7, 7, img_channels, 64),
        "bn1_g": jnp.ones((64,), jnp.float32),
        "bn1_b": jnp.zeros((64,), jnp.float32),
    }
    in_ch = 64
    stages = []
    for n_blocks, out_ch, stride in zip(
        LAYERS[num_layers], [64, 128, 256, 512], [1, 2, 2, 2]
    ):
        blocks = []
        for bi in range(n_blocks):
            s = stride if bi == 0 else 1
            bp = {
                "stride": s,
                "w1": _conv_w(next(keys), 3, 3, in_ch, out_ch),
                "g1": jnp.ones((out_ch,), jnp.float32),
                "b1": jnp.zeros((out_ch,), jnp.float32),
                "w2": _conv_w(next(keys), 3, 3, out_ch, out_ch),
                "g2": jnp.ones((out_ch,), jnp.float32),
                "b2": jnp.zeros((out_ch,), jnp.float32),
            }
            if s != 1 or in_ch != out_ch:
                bp["down_w"] = _conv_w(next(keys), 1, 1, in_ch, out_ch)
                bp["down_g"] = jnp.ones((out_ch,), jnp.float32)
                bp["down_b"] = jnp.zeros((out_ch,), jnp.float32)
            blocks.append(bp)
            in_ch = out_ch
        stages.append(blocks)
    params["stages"] = stages
    # fc weight stored as [512, num_classes] (== PyTorch fc.weight.T)
    params["fc_w"] = (
        jax.random.normal(next(keys), (512, num_classes), jnp.float32)
        / math.sqrt(512)
    )
    params["fc_b"] = jnp.zeros((num_classes,), jnp.float32)
    return params


def basic_block(x, bp):
    s = bp["stride"]
    out1 = conv_bn(x, bp["w1"], bp["g1"], bp["b1"], stride=s, padding=1, relu=True)

    # second conv: matmul+stats now, its BN/residual/ReLU fused into one epilogue
    y2, s2, q2, d2 = _conv_matmul(out1, bp["w2"], stride=1, padding=1)
    scale2, shift2 = _bn_affine(s2, q2, d2["M"], bp["g2"], bp["b2"], d2["Cpad"])

    if "down_w" in bp:
        # 1x1 downsample conv: its BN affine is fused into the same epilogue,
        # avoiding an extra HBM round trip + kernel launch per downsample block.
        yd, sd, qd, dd = _conv_matmul(x, bp["down_w"], stride=s, padding=0)
        scaled, shiftd = _bn_affine(
            sd, qd, dd["M"], bp["down_g"], bp["down_b"], dd["Cpad"]
        )
        out = _epilogue(
            y2, scale2, shift2, relu=True, TM=d2["TM"],
            res_mode="bn", res_args=(yd, scaled, shiftd),
        )
    else:
        ident = _pad2d(x.reshape(-1, x.shape[-1]), d2["Mpad"], d2["Cpad"])
        out = _epilogue(
            y2, scale2, shift2, relu=True, TM=d2["TM"],
            res_mode="plain", res_args=(ident,),
        )
    return _unpack(out, d2)


def resnet_forward(params, x_nchw):
    x = jnp.transpose(x_nchw, (0, 2, 3, 1)).astype(jnp.float32)  # NCHW -> NHWC
    x = conv_bn(
        x, params["conv1_w"], params["bn1_g"], params["bn1_b"],
        stride=2, padding=3, relu=True,
    )
    x = maxpool2d(x, k=3, stride=2, pad=1)
    for stage in params["stages"]:
        for bp in stage:
            x = basic_block(x, bp)
    return avgpool_fc(x, params["fc_w"], params["fc_b"])  # [N, num_classes]


if __name__ == "__main__":
    key = jax.random.PRNGKey(0)
    pkey, xkey = jax.random.split(key)
    params = init_resnet_params(pkey, img_channels=4, num_layers=18, num_classes=10)
    x = jax.random.normal(xkey, (2, 4, 16, 16), jnp.float32)  # NCHW, like PyTorch
    logits = resnet_forward(params, x)
    logits = jax.block_until_ready(logits)
    assert logits.shape == (2, 10) and logits.dtype == jnp.float32
    print("KERNEL_OK")
</pallas_src>

<mosaic_0001>
module attributes {stable_mosaic.version = 11 : i64} {
  func.func @_matmul_stats_kernel(%arg0: i32, %arg1: i32, %arg2: i32, %arg3: memref<128x256xbf16, #tpu.memory_space<vmem>>, %arg4: memref<256x128xbf16, #tpu.memory_space<vmem>>, %arg5: memref<128x128xf32, #tpu.memory_space<vmem>>, %arg6: memref<8x128xf32, #tpu.memory_space<vmem>>, %arg7: memref<8x128xf32, #tpu.memory_space<vmem>>, %arg8: memref<128x128xf32, #tpu.memory_space<vmem>>) attributes {dimension_semantics = [#tpu.dimension_semantics<parallel>, #tpu.dimension_semantics<parallel>, #tpu.dimension_semantics<arbitrary>], iteration_bounds = array<i64: 1, 1, 1>, scalar_prefetch = 0 : i64, scratch_operands = 1 : i64, tpu.core_type = #tpu.core_type<tc>, window_params = [{transform_indices = @transform_0, window_bounds = array<i64: 128, 256>}, {transform_indices = @transform_1, window_bounds = array<i64: 256, 128>}, {transform_indices = @transform_2, window_bounds = array<i64: 128, 128>}, {transform_indices = @transform_3, window_bounds = array<i64: 8, 128>}, {transform_indices = @transform_4, window_bounds = array<i64: 8, 128>}]} {
    %c0_i32 = arith.constant 0 : i32
    %0 = arith.cmpi eq, %arg2, %c0_i32 : i32
    %1 = arith.extui %0 : i1 to i32
    %c0_i32_0 = arith.constant 0 : i32
    %2 = arith.cmpi ne, %1, %c0_i32_0 : i32
    scf.if %2 {
      %cst_10 = arith.constant 0.000000e+00 : f32
      %12 = vector.broadcast %cst_10 : f32 to vector<128x128xf32>
      %c0_11 = arith.constant 0 : index
      %c0_12 = arith.constant 0 : index
      %13 = vector.load %arg8[%c0_11, %c0_12] : memref<128x128xf32, #tpu.memory_space<vmem>>, vector<128x128xf32>
      tpu.vector_store %arg8[%c0_11, %c0_12], %12 {strides = array<i32>} : memref<128x128xf32, #tpu.memory_space<vmem>>, vector<128x128xf32>,
    } else {
    }
    %c0 = arith.constant 0 : index
    %c0_1 = arith.constant 0 : index
    %3 = vector.load %arg8[%c0, %c0_1] : memref<128x128xf32, #tpu.memory_space<vmem>>, vector<128x128xf32>
    %c0_2 = arith.constant 0 : index
    %c0_3 = arith.constant 0 : index
    %4 = vector.load %arg3[%c0_2, %c0_3] : memref<128x256xbf16, #tpu.memory_space<vmem>>, vector<128x256xbf16>
    %c0_4 = arith.constant 0 : index
    %c0_5 = arith.constant 0 : index
    %5 = vector.load %arg4[%c0_4, %c0_5] : memref<256x128xbf16, #tpu.memory_space<vmem>>, vector<256x128xbf16>
    %cst = arith.constant dense<0.000000e+00> : vector<128x128xf32>
    %6 = tpu.matmul %4, %5, %cst {dimension_numbers = #tpu.dot_dimension_numbers<[1], [0], [0], [1], [0, 0, 1, 1], [], []>} : vector<128x256xbf16>, vector<256x128xbf16>, vector<128x128xf32> -> vector<128x128xf32>
    %7 = arith.addf %3, %6 : vector<128x128xf32>
    %c0_6 = arith.constant 0 : index
    %c0_7 = arith.constant 0 : index
    %8 = vector.load %arg8[%c0_6, %c0_7] : memref<128x128xf32, #tpu.memory_space<vmem>>, vector<128x128xf32>
    tpu.vector_store %arg8[%c0_6, %c0_7], %7 {strides = array<i32>} : memref<128x128xf32, #tpu.memory_space<vmem>>, vector<128x128xf32>,
    %c0_i32_8 = arith.constant 0 : i32
    %9 = arith.cmpi eq, %arg2, %c0_i32_8 : i32
    %10 = arith.extui %9 : i1 to i32
    %c0_i32_9 = arith.constant 0 : i32
    %11 = arith.cmpi ne, %10, %c0_i32_9 : i32
    scf.if %11 {
      %c0_10 = arith.constant 0 : index
      %c0_11 = arith.constant 0 : index
      %12 = vector.load %arg8[%c0_10, %c0_11] : memref<128x128xf32, #tpu.memory_space<vmem>>, vector<128x128xf32>
      %c0_12 = arith.constant 0 : index
      %c0_13 = arith.constant 0 : index
      %13 = vector.load %arg5[%c0_12, %c0_13] : memref<128x128xf32, #tpu.memory_space<vmem>>, vector<128x128xf32>
      tpu.vector_store %arg5[%c0_12, %c0_13], %12 {strides = array<i32>} : memref<128x128xf32, #tpu.memory_space<vmem>>, vector<128x128xf32>,
      %cst_14 = arith.constant dense<0.000000e+00> : vector<128xf32>
      %14 = vector.multi_reduction <add>, %12, %cst_14 [0] : vector<128x128xf32> to vector<128xf32>
      %15 = vector.shape_cast %14 : vector<128xf32> to vector<1x128xf32>
      %16 = arith.mulf %12, %12 : vector<128x128xf32>
      %cst_15 = arith.constant dense<0.000000e+00> : vector<128xf32>
      %17 = vector.multi_reduction <add>, %16, %cst_15 [0] : vector<128x128xf32> to vector<128xf32>
      %18 = vector.shape_cast %17 : vector<128xf32> to vector<1x128xf32>
      %19 = vector.shape_cast %15 : vector<1x128xf32> to vector<1x128xf32>
      %20 = vector.broadcast %19 : vector<1x128xf32> to vector<8x128xf32>
      %c0_16 = arith.constant 0 : index
      %c0_17 = arith.constant 0 : index
      %21 = vector.load %arg6[%c0_16, %c0_17] : memref<8x128xf32, #tpu.memory_space<vmem>>, vector<8x128xf32>
      tpu.vector_store %arg6[%c0_16, %c0_17], %20 {strides = array<i32>} : memref<8x128xf32, #tpu.memory_space<vmem>>, vector<8x128xf32>,
      %22 = vector.shape_cast %18 : vector<1x128xf32> to vector<1x128xf32>
      %23 = vector.broadcast %22 : vector<1x128xf32> to vector<8x128xf32>
      %c0_18 = arith.constant 0 : index
      %c0_19 = arith.constant 0 : index
      %24 = vector.load %arg7[%c0_18, %c0_19] : memref<8x128xf32, #tpu.memory_space<vmem>>, vector<8x128xf32>
      tpu.vector_store %arg7[%c0_18, %c0_19], %23 {strides = array<i32>} : memref<8x128xf32, #tpu.memory_space<vmem>>, vector<8x128xf32>,
    } else {
    }
    return
  }
  func.func @transform_0(%arg0: i32, %arg1: i32, %arg2: i32) -> (i32, i32) {
    %c0_i32 = arith.constant 0 : i32
    return %arg0, %arg2 : i32, i32
  }
  func.func @transform_1(%arg0: i32, %arg1: i32, %arg2: i32) -> (i32, i32) {
    %c0_i32 = arith.constant 0 : i32
    return %arg2, %arg1 : i32, i32
  }
  func.func @transform_2(%arg0: i32, %arg1: i32, %arg2: i32) -> (i32, i32) {
    %c0_i32 = arith.constant 0 : i32
    return %arg0, %arg1 : i32, i32
  }
  func.func @transform_3(%arg0: i32, %arg1: i32, %arg2: i32) -> (i32, i32) {
    %c0_i32 = arith.constant 0 : i32
    return %arg0, %arg1 : i32, i32
  }
  func.func @transform_4(%arg0: i32, %arg1: i32, %arg2: i32) -> (i32, i32) {
    %c0_i32 = arith.constant 0 : i32
    return %arg0, %arg1 : i32, i32
  }
}

</mosaic_0001>

<llo_original>
// kernel: tpu_custom_call.1
$region0: #{tpu_custom_call.1}
  #allocation0 [shape = 'u32[]', space=smem, size = 0x4, offset = 0x4, fixed_abs, tag = 'smem constant byte address 0x4 - core index']
  #allocation1 [shape = 'u32[144,128]{1,0:T(1,128)}', space=vmem, size = 0x12000, scoped, tag = 'internal scratch']
  #allocation2 [shape = 'f32[128,128]{1,0:T(8,128)}', space=vmem, size = 0x10000, scoped, tag = 'scratch operand']
  %s0 = inlined_call_operand.hbm [shape: bf16[128,256], index: 0, kind: input, shape index: {}]
  %s1 = inlined_call_operand.hbm [shape: bf16[256,128], index: 1, kind: input, shape index: {}]
  %s2 = inlined_call_operand.hbm [shape: f32[128,128], index: 2, kind: output, shape index: {0}]
  %s3 = inlined_call_operand.hbm [shape: f32[8,128], index: 3, kind: output, shape index: {1}]
  %s4 = inlined_call_operand.hbm [shape: f32[8,128], index: 4, kind: output, shape index: {2}]
  %5 = xla_tuple %s2, %s3, %s4
  %s6 = sld [smem:[#allocation0]]
  $region50: #{tpu_custom_call.1} parent=0
    _
  %s8 = ssub.s32 1, %s6
  %s9 = scalar_select 0, %s8, %s6
  $region1: #{tpu_custom_call.1} parent=0
    #allocation3 [shape = 'u8[65536]{0}', space=vmem, size = 0x10000, scoped, tag = 'input window, operand 0, single buffered']
    #allocation4 [shape = 's32[1]{0}', space=sflag, size = 0x4, scoped, tag = 'scoped memory for tpu_custom_call.1']
    #allocation5 [shape = 's32[1]{0}', space=sflag, size = 0x4, scoped, tag = 'scoped memory for tpu_custom_call.1']
    #allocation6 [shape = 'u8[65536]{0}', space=vmem, size = 0x10000, scoped, tag = 'input window, operand 1, single buffered']
    #allocation7 [shape = 's32[1]{0}', space=sflag, size = 0x4, scoped, tag = 'scoped memory for tpu_custom_call.1']
    #allocation8 [shape = 'u8[65536]{0}', space=vmem, size = 0x10000, scoped, tag = 'output window, operand 0, single buffered']
    #allocation9 [shape = 'u8[4096]{0}', space=vmem, size = 0x1000, scoped, tag = 'output window, operand 1, single buffered']
    #allocation10 [shape = 's32[1]{0}', space=sflag, size = 0x4, scoped, tag = 'scoped memory for tpu_custom_call.1']
    #allocation11 [shape = 'u8[4096]{0}', space=vmem, size = 0x1000, scoped, tag = 'output window, operand 2, single buffered']
    %10 = vsyncpa [#allocation4], 0
    %11 = vsyncpa [#allocation7], 0
    %12 = vsyncpa [#allocation5], 0
    %13 = vsyncpa [#allocation10], 0
    // Predicated region
    $region2: #{tpu_custom_call.1} parent=1 // pred_check
      _
    $region3: #{tpu_custom_call.1} parent=1 // pred_check_branch
      %15 = sbr.rel (0) target = $region5
    $region4: #{tpu_custom_call.1} parent=1 // pred_region
      %s17 = ssub.s32 2048, 2048
      %18 = vsyncadd [#allocation4], %s17
      %s19 = sshll.u32 [#allocation3], 4
      %s20 = int_to_ptr.vmem [resolvable:$true] %s19
      %25 = dma.hbm_to_vmem [thread:$0]  %s0, 2048, %s20, [#allocation4], 128, 128, 8
    $region5: #{tpu_custom_call.1} parent=1 // pred_fallthru
      _
    // Predicated region
    $region6: #{tpu_custom_call.1} parent=1 // pred_check
      _
    $region7: #{tpu_custom_call.1} parent=1 // pred_check_branch
      %27 = sbr.rel (0) target = $region9
    $region8: #{tpu_custom_call.1} parent=1 // pred_region
      %s29 = ssub.s32 2048, 2048
      %30 = vsyncadd [#allocation7], %s29
      %s31 = sshll.u32 [#allocation6], 4
      %s32 = int_to_ptr.vmem [resolvable:$true] %s31
      %37 = dma.hbm_to_vmem [thread:$0]  %s1, 2048, %s32, [#allocation7], 64, 64, 4
    $region9: #{tpu_custom_call.1} parent=1 // pred_fallthru
      _
    // Predicated region
    $region10: #{tpu_custom_call.1} parent=1 // pred_check
      _
    $region11: #{tpu_custom_call.1} parent=1 // pred_check_branch
      %39 = sbr.rel (0) target = $region13
    $region12: #{tpu_custom_call.1} parent=1 // pred_region
      %40 = dma.done [#allocation4], 2048
    $region13: #{tpu_custom_call.1} parent=1 // pred_fallthru
      _
    // Predicated region
    $region14: #{tpu_custom_call.1} parent=1 // pred_check
      _
    $region15: #{tpu_custom_call.1} parent=1 // pred_check_branch
      %42 = sbr.rel (0) target = $region17
    $region16: #{tpu_custom_call.1} parent=1 // pred_region
      %43 = dma.done [#allocation7], 2048
    $region17: #{tpu_custom_call.1} parent=1 // pred_fallthru
      _
    %p45 = scmp.eq.s32.totalorder 0, 0
    // Predicated region
    $region18: #{tpu_custom_call.1} parent=1 // pred_check
      %p46 = pneg %p45
    $region19: #{tpu_custom_call.1} parent=1 // pred_check_branch
      %48 = sbr.rel (%p46) target = $region21
    $region20: #{tpu_custom_call.1} parent=1 // pred_region
      %49 = vst [vmem:[#allocation2] sm:$0xff] 0.0
      %50 = vst [vmem:[#allocation2 + $0x8] sm:$0xff] 0.0
      %51 = vst [vmem:[#allocation2 + $0x10] sm:$0xff] 0.0
      %52 = vst [vmem:[#allocation2 + $0x18] sm:$0xff] 0.0
      %53 = vst [vmem:[#allocation2 + $0x20] sm:$0xff] 0.0
      %54 = vst [vmem:[#allocation2 + $0x28] sm:$0xff] 0.0
      %55 = vst [vmem:[#allocation2 + $0x30] sm:$0xff] 0.0
      %56 = vst [vmem:[#allocation2 + $0x38] sm:$0xff] 0.0
      %57 = vst [vmem:[#allocation2 + $0x40] sm:$0xff] 0.0
      %58 = vst [vmem:[#allocation2 + $0x48] sm:$0xff] 0.0
      %59 = vst [vmem:[#allocation2 + $0x50] sm:$0xff] 0.0
      %60 = vst [vmem:[#allocation2 + $0x58] sm:$0xff] 0.0
      %61 = vst [vmem:[#allocation2 + $0x60] sm:$0xff] 0.0
      %62 = vst [vmem:[#allocation2 + $0x68] sm:$0xff] 0.0
      %63 = vst [vmem:[#allocation2 + $0x70] sm:$0xff] 0.0
      %64 = vst [vmem:[#allocation2 + $0x78] sm:$0xff] 0.0
    $region21: #{tpu_custom_call.1} parent=1 // pred_fallthru
      _
    %v65 = vld [vmem:[#allocation2] sm:$0xff]
    %v66 = vld [vmem:[#allocation2 + $0x8] sm:$0xff]
    %v67 = vld [vmem:[#allocation2 + $0x10] sm:$0xff]
    %v68 = vld [vmem:[#allocation2 + $0x18] sm:$0xff]
    %v69 = vld [vmem:[#allocation2 + $0x20] sm:$0xff]
    %v70 = vld [vmem:[#allocation2 + $0x28] sm:$0xff]
    %v71 = vld [vmem:[#allocation2 + $0x30] sm:$0xff]
    %v72 = vld [vmem:[#allocation2 + $0x38] sm:$0xff]
    %v73 = vld [vmem:[#allocation2 + $0x40] sm:$0xff]
    %v74 = vld [vmem:[#allocation2 + $0x48] sm:$0xff]
    %v75 = vld [vmem:[#allocation2 + $0x50] sm:$0xff]
    %v76 = vld [vmem:[#allocation2 + $0x58] sm:$0xff]
    %v77 = vld [vmem:[#allocation2 + $0x60] sm:$0xff]
    %v78 = vld [vmem:[#allocation2 + $0x68] sm:$0xff]
    %v79 = vld [vmem:[#allocation2 + $0x70] sm:$0xff]
    %v80 = vld [vmem:[#allocation2 + $0x78] sm:$0xff]
    %v81 = vld [vmem:[#allocation3] sm:$0xff]
    %v82 = vld [vmem:[#allocation3 + $0x8] sm:$0xff]
    %v83 = vld [vmem:[#allocation3 + $0x10] sm:$0xff]
    %v84 = vld [vmem:[#allocation3 + $0x18] sm:$0xff]
    %v85 = vld [vmem:[#allocation3 + $0x20] sm:$0xff]
    %v86 = vld [vmem:[#allocation3 + $0x28] sm:$0xff]
    %v87 = vld [vmem:[#allocation3 + $0x30] sm:$0xff]
    %v88 = vld [vmem:[#allocation3 + $0x38] sm:$0xff]
    %v89 = vld [vmem:[#allocation3 + $0x40] sm:$0xff]
    %v90 = vld [vmem:[#allocation3 + $0x48] sm:$0xff]
    %v91 = vld [vmem:[#allocation3 + $0x50] sm:$0xff]
    %v92 = vld [vmem:[#allocation3 + $0x58] sm:$0xff]
    %v93 = vld [vmem:[#allocation3 + $0x60] sm:$0xff]
    %v94 = vld [vmem:[#allocation3 + $0x68] sm:$0xff]
    %v95 = vld [vmem:[#allocation3 + $0x70] sm:$0xff]
    %v96 = vld [vmem:[#allocation3 + $0x78] sm:$0xff]
    %v97 = vld [vmem:[#allocation6] sm:$0xf]
    %v98 = vld [vmem:[#allocation6 + $0x4] sm:$0xf]
    %v99 = vld [vmem:[#allocation6 + $0x8] sm:$0xf]
    %v100 = vld [vmem:[#allocation6 + $0xc] sm:$0xf]
    %v101 = vld [vmem:[#allocation6 + $0x10] sm:$0xf]
    %v102 = vld [vmem:[#allocation6 + $0x14] sm:$0xf]
    %v103 = vld [vmem:[#allocation6 + $0x18] sm:$0xf]
    %v104 = vld [vmem:[#allocation6 + $0x1c] sm:$0xf]
    %v105 = vld [vmem:[#allocation6 + $0x20] sm:$0xf]
    %v106 = vld [vmem:[#allocation6 + $0x24] sm:$0xf]
    %v107 = vld [vmem:[#allocation6 + $0x28] sm:$0xf]
    %v108 = vld [vmem:[#allocation6 + $0x2c] sm:$0xf]
    %v109 = vld [vmem:[#allocation6 + $0x30] sm:$0xf]
    %v110 = vld [vmem:[#allocation6 + $0x34] sm:$0xf]
    %v111 = vld [vmem:[#allocation6 + $0x38] sm:$0xf]
    %v112 = vld [vmem:[#allocation6 + $0x3c] sm:$0xf]
    %v113 = vld [vmem:[#allocation6 + $0x40] sm:$0xf]
    %v114 = vld [vmem:[#allocation6 + $0x44] sm:$0xf]
    %v115 = vld [vmem:[#allocation6 + $0x48] sm:$0xf]
    %v116 = vld [vmem:[#allocation6 + $0x4c] sm:$0xf]
    %v117 = vld [vmem:[#allocation6 + $0x50] sm:$0xf]
    %v118 = vld [vmem:[#allocation6 + $0x54] sm:$0xf]
    %v119 = vld [vmem:[#allocation6 + $0x58] sm:$0xf]
    %v120 = vld [vmem:[#allocation6 + $0x5c] sm:$0xf]
    %v121 = vld [vmem:[#allocation6 + $0x60] sm:$0xf]
    %v122 = vld [vmem:[#allocation6 + $0x64] sm:$0xf]
    %v123 = vld [vmem:[#allocation6 + $0x68] sm:$0xf]
    %v124 = vld [vmem:[#allocation6 + $0x6c] sm:$0xf]
    %v125 = vld [vmem:[#allocation6 + $0x70] sm:$0xf]
    %v126 = vld [vmem:[#allocation6 + $0x74] sm:$0xf]
    %v127 = vld [vmem:[#allocation6 + $0x78] sm:$0xf]
    %v128 = vld [vmem:[#allocation6 + $0x7c] sm:$0xf]
    %v145 = vunpack.c.l.b16 %v81
    %v146 = vunpack.c.h.b16 %v81
    %v147 = vunpack.c.l.b16 %v82
    %v148 = vunpack.c.h.b16 %v82
    %v149 = vunpack.c.l.b16 %v83
    %v150 = vunpack.c.h.b16 %v83
    %v151 = vunpack.c.l.b16 %v84
    %v152 = vunpack.c.h.b16 %v84
    %v153 = vunpack.c.l.b16 %v85
    %v154 = vunpack.c.h.b16 %v85
    %v155 = vunpack.c.l.b16 %v86
    %v156 = vunpack.c.h.b16 %v86
    %v157 = vunpack.c.l.b16 %v87
    %v158 = vunpack.c.h.b16 %v87
    %v159 = vunpack.c.l.b16 %v88
    %v160 = vunpack.c.h.b16 %v88
    %v161 = vunpack.c.l.b16 %v89
    %v162 = vunpack.c.h.b16 %v89
    %v163 = vunpack.c.l.b16 %v90
    %v164 = vunpack.c.h.b16 %v90
    %v165 = vunpack.c.l.b16 %v91
    %v166 = vunpack.c.h.b16 %v91
    %v167 = vunpack.c.l.b16 %v92
    %v168 = vunpack.c.h.b16 %v92
    %v169 = vunpack.c.l.b16 %v93
    %v170 = vunpack.c.h.b16 %v93
    %v171 = vunpack.c.l.b16 %v94
    %v172 = vunpack.c.h.b16 %v94
    %v173 = vunpack.c.l.b16 %v95
    %v174 = vunpack.c.h.b16 %v95
    %v175 = vunpack.c.l.b16 %v96
    %v176 = vunpack.c.h.b16 %v96
    %v177 = vpack.c.b16 %v147, %v145
    %v178 = vpack.c.b16 %v148, %v146
    %v179 = vpack.c.b16 %v151, %v149
    %v180 = vpack.c.b16 %v152, %v150
    %v181 = vpack.c.b16 %v155, %v153
    %v182 = vpack.c.b16 %v156, %v154
    %v183 = vpack.c.b16 %v159, %v157
    %v184 = vpack.c.b16 %v160, %v158
    %v185 = vpack.c.b16 %v163, %v161
    %v186 = vpack.c.b16 %v164, %v162
    %v187 = vpack.c.b16 %v167, %v165
    %v188 = vpack.c.b16 %v168, %v166
    %v189 = vpack.c.b16 %v171, %v169
    %v190 = vpack.c.b16 %v172, %v170
    %v191 = vpack.c.b16 %v175, %v173
    %v192 = vpack.c.b16 %v176, %v174
    %v241 = vunpack.c.l.b16 %v97
    %v242 = vunpack.c.l.b16 %v98
    %v243 = vunpack.c.l.b16 %v99
    %v244 = vunpack.c.l.b16 %v100
    %v245 = vunpack.c.l.b16 %v101
    %v246 = vunpack.c.l.b16 %v102
    %v247 = vunpack.c.l.b16 %v103
    %v248 = vunpack.c.l.b16 %v104
    %v249 = vunpack.c.l.b16 %v105
    %v250 = vunpack.c.l.b16 %v106
    %v251 = vunpack.c.l.b16 %v107
    %v252 = vunpack.c.l.b16 %v108
    %v253 = vunpack.c.l.b16 %v109
    %v254 = vunpack.c.l.b16 %v110
    %v255 = vunpack.c.l.b16 %v111
    %v256 = vunpack.c.l.b16 %v112
    %v257 = vunpack.c.l.b16 %v113
    %v258 = vunpack.c.l.b16 %v114
    %v259 = vunpack.c.l.b16 %v115
    %v260 = vunpack.c.l.b16 %v116
    %v261 = vunpack.c.l.b16 %v117
    %v262 = vunpack.c.l.b16 %v118
    %v263 = vunpack.c.l.b16 %v119
    %v264 = vunpack.c.l.b16 %v120
    %v265 = vunpack.c.l.b16 %v121
    %v266 = vunpack.c.l.b16 %v122
    %v267 = vunpack.c.l.b16 %v123
    %v268 = vunpack.c.l.b16 %v124
    %v269 = vunpack.c.l.b16 %v125
    %v270 = vunpack.c.l.b16 %v126
    %v271 = vunpack.c.l.b16 %v127
    %v272 = vunpack.c.l.b16 %v128
    %v273 = vpack.c.b16 %v242, %v241
    %v274 = vpack.c.b16 %v244, %v243
    %v275 = vpack.c.b16 %v246, %v245
    %v276 = vpack.c.b16 %v248, %v247
    %v277 = vpack.c.b16 %v250, %v249
    %v278 = vpack.c.b16 %v252, %v251
    %v279 = vpack.c.b16 %v254, %v253
    %v280 = vpack.c.b16 %v256, %v255
    %v281 = vpack.c.b16 %v258, %v257
    %v282 = vpack.c.b16 %v260, %v259
    %v283 = vpack.c.b16 %v262, %v261
    %v284 = vpack.c.b16 %v264, %v263
    %v285 = vpack.c.b16 %v266, %v265
    %v286 = vpack.c.b16 %v268, %v267
    %v287 = vpack.c.b16 %v270, %v269
    %v288 = vpack.c.b16 %v272, %v271
    %305 = vmatprep.subr.bf16.mxu0 0
    %306 = vmatpush1.bf16.msra.mxu0 %v273
    %307 = vmatprep.subr.bf16.mxu0 0
    %308 = vmatpush1.bf16.msra.mxu0 %v274
    %309 = vmatprep.subr.bf16.mxu0 0
    %310 = vmatpush1.bf16.msra.mxu0 %v275
    %311 = vmatprep.subr.bf16.mxu0 0
    %312 = vmatpush1.bf16.msra.mxu0 %v276
    %313 = vmatprep.subr.bf16.mxu0 0
    %314 = vmatpush1.bf16.msra.mxu0 %v277
    %315 = vmatprep.subr.bf16.mxu0 0
    %316 = vmatpush1.bf16.msra.mxu0 %v278
    %317 = vmatprep.subr.bf16.mxu0 0
    %318 = vmatpush1.bf16.msra.mxu0 %v279
    %319 = vmatprep.subr.bf16.mxu0 0
    %320 = vmatpush1.bf16.msra.mxu0 %v280
    %321 = vmatprep.subr.bf16.mxu0 0
    %322 = vmatpush1.bf16.msra.mxu0 %v281
    %323 = vmatprep.subr.bf16.mxu0 0
    %324 = vmatpush1.bf16.msra.mxu0 %v282
    %325 = vmatprep.subr.bf16.mxu0 0
    %326 = vmatpush1.bf16.msra.mxu0 %v283
    %327 = vmatprep.subr.bf16.mxu0 0
    %328 = vmatpush1.bf16.msra.mxu0 %v284
    %329 = vmatprep.subr.bf16.mxu0 0
    %330 = vmatpush1.bf16.msra.mxu0 %v285
    %331 = vmatprep.subr.bf16.mxu0 0
    %332 = vmatpush1.bf16.msra.mxu0 %v286
    %333 = vmatprep.subr.bf16.mxu0 0
    %334 = vmatpush1.bf16.msra.mxu0 %v287
    %335 = vmatprep.subr.bf16.mxu0 0
    %336 = vmatpush1.bf16.msra.mxu0 %v288
    %337 = vmatprep.mubr.bf16.mxu0 %v178
    %338 = vmatmul.mubr.bf16.gmra.mrb[0].mxu0 %v177
    %v339 = vpop.f32.mrb[0].mxu0
    %v340 = vadd.f32 0.0, %v339
    %v341 = vpop.f32.mrb[0].mxu0
    %v342 = vpop.f32.mrb[0].mxu0
    %v343 = vadd.f32 0.0, %v342
    %v344 = vpop.f32.mrb[0].mxu0
    %345 = vmatprep.mubr.bf16.mxu0 %v180
    %346 = vmatmul.mubr.bf16.gmra.mrb[0].mxu0 %v179
    %v347 = vpop.f32.mrb[0].mxu0
    %v348 = vadd.f32 0.0, %v347
    %v349 = vpop.f32.mrb[0].mxu0
    %v350 = vpop.f32.mrb[0].mxu0
    %v351 = vadd.f32 0.0, %v350
    %v352 = vpop.f32.mrb[0].mxu0
    %353 = vmatprep.mubr.bf16.mxu0 %v182
    %354 = vmatmul.mubr.bf16.gmra.mrb[0].mxu0 %v181
    %v355 = vpop.f32.mrb[0].mxu0
    %v356 = vadd.f32 0.0, %v355
    %v357 = vpop.f32.mrb[0].mxu0
    %v358 = vpop.f32.mrb[0].mxu0
    %v359 = vadd.f32 0.0, %v358
    %v360 = vpop.f32.mrb[0].mxu0
    %361 = vmatprep.mubr.bf16.mxu0 %v184
    %362 = vmatmul.mubr.bf16.gmra.mrb[0].mxu0 %v183
    %v363 = vpop.f32.mrb[0].mxu0
    %v364 = vadd.f32 0.0, %v363
    %v365 = vpop.f32.mrb[0].mxu0
    %v366 = vpop.f32.mrb[0].mxu0
    %v367 = vadd.f32 0.0, %v366
    %v368 = vpop.f32.mrb[0].mxu0
    %369 = vmatprep.mubr.bf16.mxu0 %v186
    %370 = vmatmul.mubr.bf16.gmra.mrb[0].mxu0 %v185
    %v371 = vpop.f32.mrb[0].mxu0
    %v372 = vadd.f32 0.0, %v371
    %v373 = vpop.f32.mrb[0].mxu0
    %v374 = vpop.f32.mrb[0].mxu0
    %v375 = vadd.f32 0.0, %v374
    %v376 = vpop.f32.mrb[0].mxu0
    %377 = vmatprep.mubr.bf16.mxu0 %v188
    %378 = vmatmul.mubr.bf16.gmra.mrb[0].mxu0 %v187
    %v379 = vpop.f32.mrb[0].mxu0
    %v380 = vadd.f32 0.0, %v379
    %v381 = vpop.f32.mrb[0].mxu0
    %v382 = vpop.f32.mrb[0].mxu0
    %v383 = vadd.f32 0.0, %v382
    %v384 = vpop.f32.mrb[0].mxu0
    %385 = vmatprep.mubr.bf16.mxu0 %v190
    %386 = vmatmul.mubr.bf16.gmra.mrb[0].mxu0 %v189
    %v387 = vpop.f32.mrb[0].mxu0
    %v388 = vadd.f32 0.0, %v387
    %v389 = vpop.f32.mrb[0].mxu0
    %v390 = vpop.f32.mrb[0].mxu0
    %v391 = vadd.f32 0.0, %v390
    %v392 = vpop.f32.mrb[0].mxu0
    %393 = vmatprep.mubr.bf16.mxu0 %v192
    %394 = vmatmul.mubr.bf16.gmra.mrb[0].mxu0 %v191
    %v395 = vpop.f32.mrb[0].mxu0
    %v396 = vadd.f32 0.0, %v395
    %v397 = vpop.f32.mrb[0].mxu0
    %v398 = vpop.f32.mrb[0].mxu0
    %v399 = vadd.f32 0.0, %v398
    %v400 = vpop.f32.mrb[0].mxu0
    %401 = vdwg.mxu0
    %v402 = vadd.f32 %v65, %v340
    %v403 = vadd.f32 %v66, %v343
    %v404 = vadd.f32 %v67, %v348
    %v405 = vadd.f32 %v68, %v351
    %v406 = vadd.f32 %v69, %v356
    %v407 = vadd.f32 %v70, %v359
    %v408 = vadd.f32 %v71, %v364
    %v409 = vadd.f32 %v72, %v367
    %v410 = vadd.f32 %v73, %v372
    %v411 = vadd.f32 %v74, %v375
    %v412 = vadd.f32 %v75, %v380
    %v413 = vadd.f32 %v76, %v383
    %v414 = vadd.f32 %v77, %v388
    %v415 = vadd.f32 %v78, %v391
    %v416 = vadd.f32 %v79, %v396
    %v417 = vadd.f32 %v80, %v399
    %418 = vst [vmem:[#allocation2] sm:$0xff] %v402
    %419 = vst [vmem:[#allocation2 + $0x8] sm:$0xff] %v403
    %420 = vst [vmem:[#allocation2 + $0x10] sm:$0xff] %v404
    %421 = vst [vmem:[#allocation2 + $0x18] sm:$0xff] %v405
    %422 = vst [vmem:[#allocation2 + $0x20] sm:$0xff] %v406
    %423 = vst [vmem:[#allocation2 + $0x28] sm:$0xff] %v407
    %424 = vst [vmem:[#allocation2 + $0x30] sm:$0xff] %v408
    %425 = vst [vmem:[#allocation2 + $0x38] sm:$0xff] %v409
    %426 = vst [vmem:[#allocation2 + $0x40] sm:$0xff] %v410
    %427 = vst [vmem:[#allocation2 + $0x48] sm:$0xff] %v411
    %428 = vst [vmem:[#allocation2 + $0x50] sm:$0xff] %v412
    %429 = vst [vmem:[#allocation2 + $0x58] sm:$0xff] %v413
    %430 = vst [vmem:[#allocation2 + $0x60] sm:$0xff] %v414
    %431 = vst [vmem:[#allocation2 + $0x68] sm:$0xff] %v415
    %432 = vst [vmem:[#allocation2 + $0x70] sm:$0xff] %v416
    %433 = vst [vmem:[#allocation2 + $0x78] sm:$0xff] %v417
    // Predicated region
    $region22: #{tpu_custom_call.1} parent=1 // pred_check
      %p434 = pneg %p45
    $region23: #{tpu_custom_call.1} parent=1 // pred_check_branch
      %436 = sbr.rel (%p434) target = $region25
    $region24: #{tpu_custom_call.1} parent=1 // pred_region
      %v437 = vld [vmem:[#allocation2] sm:$0xff]
      %v438 = vld [vmem:[#allocation2 + $0x8] sm:$0xff]
      %v439 = vld [vmem:[#allocation2 + $0x10] sm:$0xff]
      %v440 = vld [vmem:[#allocation2 + $0x18] sm:$0xff]
      %v441 = vld [vmem:[#allocation2 + $0x20] sm:$0xff]
      %v442 = vld [vmem:[#allocation2 + $0x28] sm:$0xff]
      %v443 = vld [vmem:[#allocation2 + $0x30] sm:$0xff]
      %v444 = vld [vmem:[#allocation2 + $0x38] sm:$0xff]
      %v445 = vld [vmem:[#allocation2 + $0x40] sm:$0xff]
      %v446 = vld [vmem:[#allocation2 + $0x48] sm:$0xff]
      %v447 = vld [vmem:[#allocation2 + $0x50] sm:$0xff]
      %v448 = vld [vmem:[#allocation2 + $0x58] sm:$0xff]
      %v449 = vld [vmem:[#allocation2 + $0x60] sm:$0xff]
      %v450 = vld [vmem:[#allocation2 + $0x68] sm:$0xff]
      %v451 = vld [vmem:[#allocation2 + $0x70] sm:$0xff]
      %v452 = vld [vmem:[#allocation2 + $0x78] sm:$0xff]
      %453 = vst [vmem:[#allocation8] sm:$0xff] %v437
      %454 = vst [vmem:[#allocation8 + $0x8] sm:$0xff] %v438
      %455 = vst [vmem:[#allocation8 + $0x10] sm:$0xff] %v439
      %456 = vst [vmem:[#allocation8 + $0x18] sm:$0xff] %v440
      %457 = vst [vmem:[#allocation8 + $0x20] sm:$0xff] %v441
      %458 = vst [vmem:[#allocation8 + $0x28] sm:$0xff] %v442
      %459 = vst [vmem:[#allocation8 + $0x30] sm:$0xff] %v443
      %460 = vst [vmem:[#allocation8 + $0x38] sm:$0xff] %v444
      %461 = vst [vmem:[#allocation8 + $0x40] sm:$0xff] %v445
      %462 = vst [vmem:[#allocation8 + $0x48] sm:$0xff] %v446
      %463 = vst [vmem:[#allocation8 + $0x50] sm:$0xff] %v447
      %464 = vst [vmem:[#allocation8 + $0x58] sm:$0xff] %v448
      %465 = vst [vmem:[#allocation8 + $0x60] sm:$0xff] %v449
      %466 = vst [vmem:[#allocation8 + $0x68] sm:$0xff] %v450
      %467 = vst [vmem:[#allocation8 + $0x70] sm:$0xff] %v451
      %468 = vst [vmem:[#allocation8 + $0x78] sm:$0xff] %v452
      %v469 = vadd.f32 %v437, %v438
      %v470 = vadd.f32 %v469, %v439
      %v471 = vadd.f32 %v470, %v440
      %v472 = vadd.f32 %v471, %v441
      %v473 = vadd.f32 %v472, %v442
      %v474 = vadd.f32 %v473, %v443
      %v475 = vadd.f32 %v474, %v444
      %v476 = vadd.f32 %v475, %v445
      %v477 = vadd.f32 %v476, %v446
      %v478 = vadd.f32 %v477, %v447
      %v479 = vadd.f32 %v478, %v448
      %v480 = vadd.f32 %v479, %v449
      %v481 = vadd.f32 %v480, %v450
      %v482 = vadd.f32 %v481, %v451
      %v483 = vadd.f32 %v482, %v452
      %v484 = vrot.slane %v483, 4
      %v485 = vadd.f32 %v483, %v484
      %v486 = vrot.slane %v485, 2
      %v487 = vadd.f32 %v485, %v486
      %v488 = vrot.slane %v487, 1
      %v489 = vadd.f32 %v487, %v488
      %v490 = vmul.f32 %v437, %v437
      %v491 = vmul.f32 %v438, %v438
      %v492 = vmul.f32 %v439, %v439
      %v493 = vmul.f32 %v440, %v440
      %v494 = vmul.f32 %v441, %v441
      %v495 = vmul.f32 %v442, %v442
      %v496 = vmul.f32 %v443, %v443
      %v497 = vmul.f32 %v444, %v444
      %v498 = vmul.f32 %v445, %v445
      %v499 = vmul.f32 %v446, %v446
      %v500 = vmul.f32 %v447, %v447
      %v501 = vmul.f32 %v448, %v448
      %v502 = vmul.f32 %v449, %v449
      %v503 = vmul.f32 %v450, %v450
      %v504 = vmul.f32 %v451, %v451
      %v505 = vmul.f32 %v452, %v452
      %v506 = vadd.f32 %v490, %v491
      %v507 = vadd.f32 %v506, %v492
      %v508 = vadd.f32 %v507, %v493
      %v509 = vadd.f32 %v508, %v494
      %v510 = vadd.f32 %v509, %v495
      %v511 = vadd.f32 %v510, %v496
      %v512 = vadd.f32 %v511, %v497
      %v513 = vadd.f32 %v512, %v498
      %v514 = vadd.f32 %v513, %v499
      %v515 = vadd.f32 %v514, %v500
      %v516 = vadd.f32 %v515, %v501
      %v517 = vadd.f32 %v516, %v502
      %v518 = vadd.f32 %v517, %v503
      %v519 = vadd.f32 %v518, %v504
      %v520 = vadd.f32 %v519, %v505
      %v521 = vrot.slane %v520, 4
      %v522 = vadd.f32 %v520, %v521
      %v523 = vrot.slane %v522, 2
      %v524 = vadd.f32 %v522, %v523
      %v525 = vrot.slane %v524, 1
      %v526 = vadd.f32 %v524, %v525
      %527 = vst [vmem:[#allocation9] sm:$0xff] %v489
      %528 = vst [vmem:[#allocation11] sm:$0xff] %v526
    $region25: #{tpu_custom_call.1} parent=1 // pred_fallthru
      _
    // Predicated region
    $region26: #{tpu_custom_call.1} parent=1 // pred_check
      _
    $region27: #{tpu_custom_call.1} parent=1 // pred_check_branch
      %530 = sbr.rel (0) target = $region29
    $region28: #{tpu_custom_call.1} parent=1 // pred_region
      %s532 = ssub.s32 2048, 2048
      %533 = vsyncadd [#allocation5], %s532
      %s534 = sshll.u32 [#allocation8], 4
      %s535 = int_to_ptr.vmem [resolvable:$true] %s534
      %540 = dma.vmem_to_hbm [thread:$0]  %s535, 2048, %s2, [#allocation5], 128, 128, 8
    $region29: #{tpu_custom_call.1} parent=1 // pred_fallthru
      _
    // Predicated region
    $region30: #{tpu_custom_call.1} parent=1 // pred_check
      _
    $region31: #{tpu_custom_call.1} parent=1 // pred_check_branch
      %542 = sbr.rel (0) target = $region33
    $region32: #{tpu_custom_call.1} parent=1 // pred_region
      %s544 = ssub.s32 128, 128
      %545 = vsyncadd [#allocation10], %s544
      %s547 = sshll.u32 [#allocation9], 4
      %s548 = int_to_ptr.vmem [resolvable:$true] %s547
      %550 = dma.vmem_to_hbm [thread:$0]  %s548, 128, %s3, [#allocation10]
    $region33: #{tpu_custom_call.1} parent=1 // pred_fallthru
      _
    // Predicated region
    $region34: #{tpu_custom_call.1} parent=1 // pred_check
      _
    $region35: #{tpu_custom_call.1} parent=1 // pred_check_branch
      %552 = sbr.rel (0) target = $region37
    $region36: #{tpu_custom_call.1} parent=1 // pred_region
      %s554 = ssub.s32 128, 128
      %555 = vsyncadd [#allocation10], %s554
      %s557 = sshll.u32 [#allocation11], 4
      %s558 = int_to_ptr.vmem [resolvable:$true] %s557
      %560 = dma.vmem_to_hbm [thread:$0]  %s558, 128, %s4, [#allocation10]
    $region37: #{tpu_custom_call.1} parent=1 // pred_fallthru
      _
    // Predicated region
    $region38: #{tpu_custom_call.1} parent=1 // pred_check
      _
    $region39: #{tpu_custom_call.1} parent=1 // pred_check_branch
      %562 = sbr.rel (0) target = $region41
    $region40: #{tpu_custom_call.1} parent=1 // pred_region
      %563 = dma.done [#allocation5], 2048
    $region41: #{tpu_custom_call.1} parent=1 // pred_fallthru
      _
    // Predicated region
    $region42: #{tpu_custom_call.1} parent=1 // pred_check
      _
    $region43: #{tpu_custom_call.1} parent=1 // pred_check_branch
      %565 = sbr.rel (0) target = $region45
    $region44: #{tpu_custom_call.1} parent=1 // pred_region
      %566 = dma.done [#allocation10], 128
    $region45: #{tpu_custom_call.1} parent=1 // pred_fallthru
      _
    // Predicated region
    $region46: #{tpu_custom_call.1} parent=1 // pred_check
      _
    $region47: #{tpu_custom_call.1} parent=1 // pred_check_branch
      %568 = sbr.rel (0) target = $region49
    $region48: #{tpu_custom_call.1} parent=1 // pred_region
      %569 = dma.done [#allocation10], 128
    $region49: #{tpu_custom_call.1} parent=1 // pred_fallthru
      _
    %570 = vsyncpa [#allocation4], 1
    %571 = vsyncpa [#allocation7], 1
    %572 = vsyncpa [#allocation5], 1
    %573 = vsyncpa [#allocation10], 1

</llo_original>
